<compile_context>
chip_gen: v5e
topology: v5e:2x2
jax: 0.10.0
libtpu: 0.0.40
codegen_flags: <defaults>
</compile_context>

<pallas_src>
import functools

import jax
import jax.numpy as jnp
from jax.experimental import pallas as pl
from jax.experimental.pallas import tpu as pltpu

_MIN_TB = 8  # sublane multiple


def _round_up(x, m):
    return ((x + m - 1) // m) * m


def qnet_kernel(x_ref, w1_ref, b1_ref, w2_ref, b2_ref, w3_ref, b3_ref, o_ref):
    # fc1 + ReLU  (bf16 operands, f32 accumulation, f32 elementwise)
    h1 = jnp.dot(x_ref[...], w1_ref[...], preferred_element_type=jnp.float32)
    h1 = jnp.maximum(h1 + b1_ref[...], 0.0)
    # fc2 + ReLU
    h2 = jnp.dot(h1.astype(jnp.bfloat16), w2_ref[...],
                 preferred_element_type=jnp.float32)
    h2 = jnp.maximum(h2 + b2_ref[...], 0.0)
    # q_layer (no activation); output block is (tb, num_actions) -> narrow HBM
    # writeback (masked vst in VMEM, but 32x less HBM write traffic).
    q = jnp.dot(h2.astype(jnp.bfloat16), w3_ref[...],
                preferred_element_type=jnp.float32)
    o_ref[...] = (q + b3_ref[...]).astype(o_ref.dtype)


def prepare_params(params):
    """One-time prep (call once, outside the acting/training loop).

    Takes PyTorch-style params: w* are (out_dim, in_dim), b* are (out_dim,).
    Returns weights transposed to (in, out) and cast to bf16 (MXU-native);
    biases kept f32 as (1, out). No column padding: the kernel emits an
    unpadded (tb, num_actions) output tile. NOTE: the dict contains only
    arrays, so it can be passed straight through jit without creating traced
    Python scalars.
    """
    return {
        "w1": params["w1"].T.astype(jnp.bfloat16),
        "w2": params["w2"].T.astype(jnp.bfloat16),
        "w3": params["w3"].T.astype(jnp.bfloat16),
        "b1": params["b1"][None, :].astype(jnp.float32),
        "b2": params["b2"][None, :].astype(jnp.float32),
        "b3": params["b3"][None, :].astype(jnp.float32),
    }


def _choose_batch_tile(B, block_b):
    """Smallest sublane-aligned tile covering B with minimal padding.

    Guarantees an even number (>= 2) of grid steps whenever the batch is big
    enough to split, so v7x's two TensorCores both get work; v5e/v6e simply
    run the steps sequentially.
    """
    steps = pl.cdiv(B, block_b)
    if B >= 2 * _MIN_TB:
        steps = max(steps, 2)
        if steps % 2:
            steps += 1
    tb = _round_up(pl.cdiv(B, steps), _MIN_TB)
    b_pad = _round_up(B, tb)
    return tb, b_pad


@functools.partial(jax.jit, static_argnames=("block_b",))
def qnetwork_forward(x, prepped, block_b=1024):
    """x: (B, state_dim) float32. prepped: output of prepare_params."""
    B, state_dim = x.shape
    hidden = prepped["w1"].shape[1]         # static
    num_actions = prepped["w3"].shape[1]    # static

    tb, b_pad = _choose_batch_tile(B, block_b)
    grid = (b_pad // tb,)

    # Cast once in the wrapper: halves the activation DMA and removes the
    # per-step in-kernel cast.
    x = x.astype(jnp.bfloat16)
    if b_pad != B:
        x = jnp.pad(x, ((0, b_pad - B), (0, 0)))

    flops = 2 * b_pad * (state_dim * hidden + hidden * hidden
                         + hidden * num_actions)
    bytes_accessed = (
        b_pad * state_dim * 2                      # x, bf16
        + sum(prepped[k].size * prepped[k].dtype.itemsize
              for k in ("w1", "b1", "w2", "b2", "w3", "b3"))
        + b_pad * num_actions * 4                  # q, f32
    )

    out = pl.pallas_call(
        qnet_kernel,
        out_shape=jax.ShapeDtypeStruct((b_pad, num_actions), jnp.float32),
        grid=grid,
        in_specs=[
            # activations: tiled over batch, pipelined
            pl.BlockSpec((tb, state_dim), lambda i: (i, 0)),
            # weights/biases: constant index_map -> fetched once, VMEM-resident
            pl.BlockSpec((state_dim, hidden), lambda i: (0, 0)),
            pl.BlockSpec((1, hidden), lambda i: (0, 0)),
            pl.BlockSpec((hidden, hidden), lambda i: (0, 0)),
            pl.BlockSpec((1, hidden), lambda i: (0, 0)),
            pl.BlockSpec((hidden, num_actions), lambda i: (0, 0)),
            pl.BlockSpec((1, num_actions), lambda i: (0, 0)),
        ],
        out_specs=pl.BlockSpec((tb, num_actions), lambda i: (i, 0)),
        compiler_params=pltpu.CompilerParams(
            dimension_semantics=("parallel",),       # megacore on v7x
            vmem_limit_bytes=32 * 1024 * 1024,       # fits v5e/v6e/v7x
        ),
        cost_estimate=pl.CostEstimate(
            flops=flops, transcendentals=0, bytes_accessed=bytes_accessed),
    )(x, prepped["w1"], prepped["b1"], prepped["w2"], prepped["b2"],
      prepped["w3"], prepped["b3"])

    # Only a static row slice remains (columns are already unpadded); no-op
    # when B is already tile-aligned.
    if b_pad != B:
        out = out[:B]
    return out


def init_params(key, state_dim, num_actions, hidden_dim=128):
    """Deterministic init mimicking nn.Linear's U(-1/sqrt(fan_in), 1/sqrt(fan_in))."""
    ks = jax.random.split(key, 6)

    def lin(kw, kb, in_dim, out_dim):
        bound = 1.0 / jnp.sqrt(in_dim)
        w = jax.random.uniform(kw, (out_dim, in_dim), jnp.float32, -bound, bound)
        b = jax.random.uniform(kb, (out_dim,), jnp.float32, -bound, bound)
        return w, b

    w1, b1 = lin(ks[0], ks[1], state_dim, hidden_dim)
    w2, b2 = lin(ks[2], ks[3], hidden_dim, hidden_dim)
    w3, b3 = lin(ks[4], ks[5], hidden_dim, num_actions)
    return {"w1": w1, "b1": b1, "w2": w2, "b2": b2, "w3": w3, "b3": b3}


if __name__ == "__main__":
    key = jax.random.PRNGKey(0)
    k_x, k_p = jax.random.split(key)

    B, state_dim, num_actions, hidden_dim = 4, 8, 4, 128
    x = jax.random.normal(k_x, (B, state_dim), jnp.float32)
    params = init_params(k_p, state_dim, num_actions, hidden_dim)

    prepped = prepare_params(params)          # one-time prep, outside hot loop
    q = qnetwork_forward(x, prepped)
    jax.block_until_ready(q)

    # Pure-JAX reference on the same bf16-operand / f32-accumulate path.
    # NOTE: intentionally diverges from PyTorch's f32 nn.Linear at the ~1e-3
    # per-element level (bf16 MXU operands); fine for Q-networks.
    def ref(x, p):
        bf = jnp.bfloat16
        h1 = jnp.maximum(
            jnp.dot(x.astype(bf), p["w1"].T.astype(bf),
                    preferred_element_type=jnp.float32) + p["b1"], 0.0)
        h2 = jnp.maximum(
            jnp.dot(h1.astype(bf), p["w2"].T.astype(bf),
                    preferred_element_type=jnp.float32) + p["b2"], 0.0)
        return jnp.dot(h2.astype(bf), p["w3"].T.astype(bf),
                       preferred_element_type=jnp.float32) + p["b3"]

    q_ref = ref(x, params)
    assert q.shape == (B, num_actions), q.shape
    assert jnp.allclose(q, q_ref, atol=5e-3, rtol=5e-3), (
        float(jnp.max(jnp.abs(q - q_ref))))

    print("KERNEL_OK")
</pallas_src>

<mosaic_0001>
module attributes {stable_mosaic.version = 11 : i64} {
  func.func @qnet_kernel(%arg0: i32, %arg1: memref<8x8xbf16, #tpu.memory_space<vmem>>, %arg2: memref<8x128xbf16, #tpu.memory_space<vmem>>, %arg3: memref<1x128xf32, #tpu.memory_space<vmem>>, %arg4: memref<128x128xbf16, #tpu.memory_space<vmem>>, %arg5: memref<1x128xf32, #tpu.memory_space<vmem>>, %arg6: memref<128x4xbf16, #tpu.memory_space<vmem>>, %arg7: memref<1x4xf32, #tpu.memory_space<vmem>>, %arg8: memref<8x4xf32, #tpu.memory_space<vmem>>) attributes {dimension_semantics = [#tpu.dimension_semantics<parallel>], iteration_bounds = array<i64: 1>, scalar_prefetch = 0 : i64, scratch_operands = 0 : i64, tpu.core_type = #tpu.core_type<tc>, window_params = [{transform_indices = @transform_0, window_bounds = array<i64: 8, 8>}, {pipeline_mode = #tpu.pipeline_mode<synchronous>, transform_indices = @transform_1, window_bounds = array<i64: 8, 128>}, {pipeline_mode = #tpu.pipeline_mode<synchronous>, transform_indices = @transform_2, window_bounds = array<i64: 1, 128>}, {pipeline_mode = #tpu.pipeline_mode<synchronous>, transform_indices = @transform_3, window_bounds = array<i64: 128, 128>}, {pipeline_mode = #tpu.pipeline_mode<synchronous>, transform_indices = @transform_4, window_bounds = array<i64: 1, 128>}, {pipeline_mode = #tpu.pipeline_mode<synchronous>, transform_indices = @transform_5, window_bounds = array<i64: 128, 4>}, {pipeline_mode = #tpu.pipeline_mode<synchronous>, transform_indices = @transform_6, window_bounds = array<i64: 1, 4>}, {transform_indices = @transform_7, window_bounds = array<i64: 8, 4>}]} {
    %c0 = arith.constant 0 : index
    %c0_0 = arith.constant 0 : index
    %0 = vector.load %arg1[%c0, %c0_0] : memref<8x8xbf16, #tpu.memory_space<vmem>>, vector<8x8xbf16>
    %c0_1 = arith.constant 0 : index
    %c0_2 = arith.constant 0 : index
    %1 = vector.load %arg2[%c0_1, %c0_2] : memref<8x128xbf16, #tpu.memory_space<vmem>>, vector<8x128xbf16>
    %cst = arith.constant dense<0.000000e+00> : vector<8x128xf32>
    %2 = tpu.matmul %0, %1, %cst {dimension_numbers = #tpu.dot_dimension_numbers<[1], [0], [0], [1], [0, 0, 1, 1], [], []>} : vector<8x8xbf16>, vector<8x128xbf16>, vector<8x128xf32> -> vector<8x128xf32>
    %c0_3 = arith.constant 0 : index
    %c0_4 = arith.constant 0 : index
    %3 = vector.load %arg3[%c0_3, %c0_4] : memref<1x128xf32, #tpu.memory_space<vmem>>, vector<1x128xf32>
    %4 = vector.broadcast %3 : vector<1x128xf32> to vector<8x128xf32>
    %5 = arith.addf %2, %4 : vector<8x128xf32>
    %cst_5 = arith.constant 0.000000e+00 : f32
    %6 = vector.broadcast %cst_5 : f32 to vector<8x128xf32>
    %7 = arith.maximumf %5, %6 : vector<8x128xf32>
    %8 = arith.truncf %7 : vector<8x128xf32> to vector<8x128xbf16>
    %c0_6 = arith.constant 0 : index
    %c0_7 = arith.constant 0 : index
    %9 = vector.load %arg4[%c0_6, %c0_7] : memref<128x128xbf16, #tpu.memory_space<vmem>>, vector<128x128xbf16>
    %cst_8 = arith.constant dense<0.000000e+00> : vector<8x128xf32>
    %10 = tpu.matmul %8, %9, %cst_8 {dimension_numbers = #tpu.dot_dimension_numbers<[1], [0], [0], [1], [0, 0, 1, 1], [], []>} : vector<8x128xbf16>, vector<128x128xbf16>, vector<8x128xf32> -> vector<8x128xf32>
    %c0_9 = arith.constant 0 : index
    %c0_10 = arith.constant 0 : index
    %11 = vector.load %arg5[%c0_9, %c0_10] : memref<1x128xf32, #tpu.memory_space<vmem>>, vector<1x128xf32>
    %12 = vector.broadcast %11 : vector<1x128xf32> to vector<8x128xf32>
    %13 = arith.addf %10, %12 : vector<8x128xf32>
    %cst_11 = arith.constant 0.000000e+00 : f32
    %14 = vector.broadcast %cst_11 : f32 to vector<8x128xf32>
    %15 = arith.maximumf %13, %14 : vector<8x128xf32>
    %16 = arith.truncf %15 : vector<8x128xf32> to vector<8x128xbf16>
    %c0_12 = arith.constant 0 : index
    %c0_13 = arith.constant 0 : index
    %17 = vector.load %arg6[%c0_12, %c0_13] : memref<128x4xbf16, #tpu.memory_space<vmem>>, vector<128x4xbf16>
    %cst_14 = arith.constant dense<0.000000e+00> : vector<8x4xf32>
    %18 = tpu.matmul %16, %17, %cst_14 {dimension_numbers = #tpu.dot_dimension_numbers<[1], [0], [0], [1], [0, 0, 1, 1], [], []>} : vector<8x128xbf16>, vector<128x4xbf16>, vector<8x4xf32> -> vector<8x4xf32>
    %c0_15 = arith.constant 0 : index
    %c0_16 = arith.constant 0 : index
    %19 = vector.load %arg7[%c0_15, %c0_16] : memref<1x4xf32, #tpu.memory_space<vmem>>, vector<1x4xf32>
    %20 = vector.broadcast %19 : vector<1x4xf32> to vector<8x4xf32>
    %21 = arith.addf %18, %20 : vector<8x4xf32>
    %c0_17 = arith.constant 0 : index
    %c0_18 = arith.constant 0 : index
    %22 = vector.load %arg8[%c0_17, %c0_18] : memref<8x4xf32, #tpu.memory_space<vmem>>, vector<8x4xf32>
    tpu.vector_store %arg8[%c0_17, %c0_18], %21 {strides = array<i32>} : memref<8x4xf32, #tpu.memory_space<vmem>>, vector<8x4xf32>,
    return
  }
  func.func @transform_0(%arg0: i32) -> (i32, i32) {
    %c0_i32 = arith.constant 0 : i32
    %c0_i32_0 = arith.constant 0 : i32
    return %arg0, %c0_i32 : i32, i32
  }
  func.func @transform_1(%arg0: i32) -> (i32, i32) {
    %c0_i32 = arith.constant 0 : i32
    %c0_i32_0 = arith.constant 0 : i32
    %c0_i32_1 = arith.constant 0 : i32
    return %c0_i32, %c0_i32_0 : i32, i32
  }
  func.func @transform_2(%arg0: i32) -> (i32, i32) {
    %c0_i32 = arith.constant 0 : i32
    %c0_i32_0 = arith.constant 0 : i32
    %c0_i32_1 = arith.constant 0 : i32
    return %c0_i32, %c0_i32_0 : i32, i32
  }
  func.func @transform_3(%arg0: i32) -> (i32, i32) {
    %c0_i32 = arith.constant 0 : i32
    %c0_i32_0 = arith.constant 0 : i32
    %c0_i32_1 = arith.constant 0 : i32
    return %c0_i32, %c0_i32_0 : i32, i32
  }
  func.func @transform_4(%arg0: i32) -> (i32, i32) {
    %c0_i32 = arith.constant 0 : i32
    %c0_i32_0 = arith.constant 0 : i32
    %c0_i32_1 = arith.constant 0 : i32
    return %c0_i32, %c0_i32_0 : i32, i32
  }
  func.func @transform_5(%arg0: i32) -> (i32, i32) {
    %c0_i32 = arith.constant 0 : i32
    %c0_i32_0 = arith.constant 0 : i32
    %c0_i32_1 = arith.constant 0 : i32
    return %c0_i32, %c0_i32_0 : i32, i32
  }
  func.func @transform_6(%arg0: i32) -> (i32, i32) {
    %c0_i32 = arith.constant 0 : i32
    %c0_i32_0 = arith.constant 0 : i32
    %c0_i32_1 = arith.constant 0 : i32
    return %c0_i32, %c0_i32_0 : i32, i32
  }
  func.func @transform_7(%arg0: i32) -> (i32, i32) {
    %c0_i32 = arith.constant 0 : i32
    %c0_i32_0 = arith.constant 0 : i32
    return %arg0, %c0_i32 : i32, i32
  }
}

</mosaic_0001>

<llo_original>
// kernel: qnetwork_forward.1
$region0: #{qnetwork_forward.1}
  #allocation0 [shape = 'u32[]', space=smem, size = 0x4, offset = 0x4, fixed_abs, tag = 'smem constant byte address 0x4 - core index']
  #allocation1 [shape = 'u32[72,128]{1,0:T(1,128)}', space=vmem, size = 0x9000, scoped, tag = 'internal scratch']
  %s0 = inlined_call_operand.vmem [shape: bf16[8,8], index: 0, kind: input, shape index: {}]
  %s1 = inlined_call_operand.vmem [shape: bf16[8,128], index: 1, kind: input, shape index: {}]
  %s2 = inlined_call_operand.vmem [shape: f32[1,128], index: 2, kind: input, shape index: {}]
  %s3 = inlined_call_operand.vmem [shape: bf16[128,128], index: 3, kind: input, shape index: {}]
  %s4 = inlined_call_operand.vmem [shape: f32[1,128], index: 4, kind: input, shape index: {}]
  %s5 = inlined_call_operand.vmem [shape: bf16[128,4], index: 5, kind: input, shape index: {}]
  %s6 = inlined_call_operand.vmem [shape: f32[1,4], index: 6, kind: input, shape index: {}]
  %s7 = inlined_call_operand.vmem [shape: f32[8,4], index: 7, kind: output, shape index: {}]
  %s8 = sld [smem:[#allocation0]]
  $region38: #{qnetwork_forward.1} parent=0
    _
  %s10 = ssub.s32 1, %s8
  %s11 = scalar_select 0, %s10, %s8
  // Predicated region
  $region2: #{qnetwork_forward.1} parent=0 // pred_check
    _
  $region3: #{qnetwork_forward.1} parent=0 // pred_check_branch
    %13 = sbr.rel (0) target = $region5
  $region4: #{qnetwork_forward.1} parent=0 // pred_region
    _
  $region5: #{qnetwork_forward.1} parent=0 // pred_fallthru
    _
  // Predicated region
  $region6: #{qnetwork_forward.1} parent=0 // pred_check
    _
  $region7: #{qnetwork_forward.1} parent=0 // pred_check_branch
    %15 = sbr.rel (0) target = $region9
  $region8: #{qnetwork_forward.1} parent=0 // pred_region
    _
  $region9: #{qnetwork_forward.1} parent=0 // pred_fallthru
    _
  // Predicated region
  $region10: #{qnetwork_forward.1} parent=0 // pred_check
    _
  $region11: #{qnetwork_forward.1} parent=0 // pred_check_branch
    %17 = sbr.rel (0) target = $region13
  $region12: #{qnetwork_forward.1} parent=0 // pred_region
    _
  $region13: #{qnetwork_forward.1} parent=0 // pred_fallthru
    _
  // Predicated region
  $region14: #{qnetwork_forward.1} parent=0 // pred_check
    _
  $region15: #{qnetwork_forward.1} parent=0 // pred_check_branch
    %19 = sbr.rel (0) target = $region17
  $region16: #{qnetwork_forward.1} parent=0 // pred_region
    _
  $region17: #{qnetwork_forward.1} parent=0 // pred_fallthru
    _
  // Predicated region
  $region18: #{qnetwork_forward.1} parent=0 // pred_check
    _
  $region19: #{qnetwork_forward.1} parent=0 // pred_check_branch
    %21 = sbr.rel (0) target = $region21
  $region20: #{qnetwork_forward.1} parent=0 // pred_region
    _
  $region21: #{qnetwork_forward.1} parent=0 // pred_fallthru
    _
  // Predicated region
  $region22: #{qnetwork_forward.1} parent=0 // pred_check
    _
  $region23: #{qnetwork_forward.1} parent=0 // pred_check_branch
    %23 = sbr.rel (0) target = $region25
  $region24: #{qnetwork_forward.1} parent=0 // pred_region
    _
  $region25: #{qnetwork_forward.1} parent=0 // pred_fallthru
    _
  // Predicated region
  $region26: #{qnetwork_forward.1} parent=0 // pred_check
    _
  $region27: #{qnetwork_forward.1} parent=0 // pred_check_branch
    %25 = sbr.rel (0) target = $region29
  $region28: #{qnetwork_forward.1} parent=0 // pred_region
    _
  $region29: #{qnetwork_forward.1} parent=0 // pred_fallthru
    _
  %v27 = vld [vmem:[%s0] sm:$0xf]
  %v28 = vld [vmem:[%s1] sm:$0xf]
  %v29 = vld [vmem:[%s2] sm:$0x1]
  %v31 = vperm.slane %v29, 0
  %vm33 = vcmask 64512
  %v35 = vsel %vm33, %v27, 0
  %vm37 = vcmask 1043456
  %v39 = vsel %vm37, %v28, 0
  %41 = vmatpush.bf16.msra.mxu0 0
  %42 = vmatpush.bf16.msra.mxu0 0
  %43 = vmatpush.bf16.msra.mxu0 0
  %44 = vmatpush.bf16.msra.mxu0 0
  %45 = vmatpush.bf16.msra.mxu0 0
  %46 = vmatpush.bf16.msra.mxu0 0
  %47 = vmatpush.bf16.msra.mxu0 0
  %48 = vmatpush.bf16.msra.mxu0 %v39
  %49 = vmatmul.bf16.gmra.mxu0 %v35
  %v50 = vpop.f32.mrf.mxu0
  %v51 = vadd.f32 %v31, %v50
  %v52 = vpop.f32.mrf.mxu0
  %53 = vdwg.mxu0
  %v54 = vmax.f32 %v51, 0.0
  %v55 = vpack.c.bf16 %v54, %v54
  %v56 = vld [vmem:[%s3] sm:$0xf]
  %v57 = vld [vmem:[%s3 + $0x4] sm:$0xf]
  %v58 = vld [vmem:[%s3 + $0x8] sm:$0xf]
  %v59 = vld [vmem:[%s3 + $0xc] sm:$0xf]
  %v60 = vld [vmem:[%s3 + $0x10] sm:$0xf]
  %v61 = vld [vmem:[%s3 + $0x14] sm:$0xf]
  %v62 = vld [vmem:[%s3 + $0x18] sm:$0xf]
  %v63 = vld [vmem:[%s3 + $0x1c] sm:$0xf]
  %v64 = vld [vmem:[%s3 + $0x20] sm:$0xf]
  %v65 = vld [vmem:[%s3 + $0x24] sm:$0xf]
  %v66 = vld [vmem:[%s3 + $0x28] sm:$0xf]
  %v67 = vld [vmem:[%s3 + $0x2c] sm:$0xf]
  %v68 = vld [vmem:[%s3 + $0x30] sm:$0xf]
  %v69 = vld [vmem:[%s3 + $0x34] sm:$0xf]
  %v70 = vld [vmem:[%s3 + $0x38] sm:$0xf]
  %v71 = vld [vmem:[%s3 + $0x3c] sm:$0xf]
  %v72 = vld [vmem:[%s4] sm:$0x1]
  %v74 = vperm.slane %v72, 0
  %v92 = vunpack.c.l.b16 %v56
  %v93 = vunpack.c.l.b16 %v57
  %v94 = vunpack.c.l.b16 %v58
  %v95 = vunpack.c.l.b16 %v59
  %v96 = vunpack.c.l.b16 %v60
  %v97 = vunpack.c.l.b16 %v61
  %v98 = vunpack.c.l.b16 %v62
  %v99 = vunpack.c.l.b16 %v63
  %v100 = vunpack.c.l.b16 %v64
  %v101 = vunpack.c.l.b16 %v65
  %v102 = vunpack.c.l.b16 %v66
  %v103 = vunpack.c.l.b16 %v67
  %v104 = vunpack.c.l.b16 %v68
  %v105 = vunpack.c.l.b16 %v69
  %v106 = vunpack.c.l.b16 %v70
  %v107 = vunpack.c.l.b16 %v71
  %v108 = vpack.c.b16 %v93, %v92
  %v109 = vpack.c.b16 %v95, %v94
  %v110 = vpack.c.b16 %v97, %v96
  %v111 = vpack.c.b16 %v99, %v98
  %v112 = vpack.c.b16 %v101, %v100
  %v113 = vpack.c.b16 %v103, %v102
  %v114 = vpack.c.b16 %v105, %v104
  %v115 = vpack.c.b16 %v107, %v106
  %124 = vmatpush.bf16.msra.mxu0 %v115
  %125 = vmatpush.bf16.msra.mxu0 %v114
  %126 = vmatpush.bf16.msra.mxu0 %v113
  %127 = vmatpush.bf16.msra.mxu0 %v112
  %128 = vmatpush.bf16.msra.mxu0 %v111
  %129 = vmatpush.bf16.msra.mxu0 %v110
  %130 = vmatpush.bf16.msra.mxu0 %v109
  %131 = vmatpush.bf16.msra.mxu0 %v108
  %132 = vmatmul.bf16.gmra.mxu0 %v55
  %v133 = vpop.f32.mrf.mxu0
  %v134 = vadd.f32 %v74, %v133
  %v135 = vpop.f32.mrf.mxu0
  %136 = vdwg.mxu0
  %v137 = vmax.f32 %v134, 0.0
  %v138 = vpack.c.bf16 %v137, %v137
  %v139 = vld [vmem:[%s5] sm:$0xf]
  %v140 = vld [vmem:[%s5 + $0x4] sm:$0xf]
  %v141 = vld [vmem:[%s5 + $0x8] sm:$0xf]
  %v142 = vld [vmem:[%s5 + $0xc] sm:$0xf]
  %v143 = vld [vmem:[%s5 + $0x10] sm:$0xf]
  %v144 = vld [vmem:[%s5 + $0x14] sm:$0xf]
  %v145 = vld [vmem:[%s5 + $0x18] sm:$0xf]
  %v146 = vld [vmem:[%s5 + $0x1c] sm:$0xf]
  %v147 = vld [vmem:[%s5 + $0x20] sm:$0xf]
  %v148 = vld [vmem:[%s5 + $0x24] sm:$0xf]
  %v149 = vld [vmem:[%s5 + $0x28] sm:$0xf]
  %v150 = vld [vmem:[%s5 + $0x2c] sm:$0xf]
  %v151 = vld [vmem:[%s5 + $0x30] sm:$0xf]
  %v152 = vld [vmem:[%s5 + $0x34] sm:$0xf]
  %v153 = vld [vmem:[%s5 + $0x38] sm:$0xf]
  %v154 = vld [vmem:[%s5 + $0x3c] sm:$0xf]
  %v155 = vld [vmem:[%s6] sm:$0x1]
  %v157 = vperm.slane %v155, 0
  %v175 = vunpack.c.l.b16 %v139
  %v176 = vunpack.c.l.b16 %v140
  %v177 = vunpack.c.l.b16 %v141
  %v178 = vunpack.c.l.b16 %v142
  %v179 = vunpack.c.l.b16 %v143
  %v180 = vunpack.c.l.b16 %v144
  %v181 = vunpack.c.l.b16 %v145
  %v182 = vunpack.c.l.b16 %v146
  %v183 = vunpack.c.l.b16 %v147
  %v184 = vunpack.c.l.b16 %v148
  %v185 = vunpack.c.l.b16 %v149
  %v186 = vunpack.c.l.b16 %v150
  %v187 = vunpack.c.l.b16 %v151
  %v188 = vunpack.c.l.b16 %v152
  %v189 = vunpack.c.l.b16 %v153
  %v190 = vunpack.c.l.b16 %v154
  %v191 = vpack.c.b16 %v176, %v175
  %v192 = vpack.c.b16 %v178, %v177
  %v193 = vpack.c.b16 %v180, %v179
  %v194 = vpack.c.b16 %v182, %v181
  %v195 = vpack.c.b16 %v184, %v183
  %v196 = vpack.c.b16 %v186, %v185
  %v197 = vpack.c.b16 %v188, %v187
  %v198 = vpack.c.b16 %v190, %v189
  %207 = vmatpush.bf16.msra.mxu0 %v198
  %208 = vmatpush.bf16.msra.mxu0 %v197
  %209 = vmatpush.bf16.msra.mxu0 %v196
  %210 = vmatpush.bf16.msra.mxu0 %v195
  %211 = vmatpush.bf16.msra.mxu0 %v194
  %212 = vmatpush.bf16.msra.mxu0 %v193
  %213 = vmatpush.bf16.msra.mxu0 %v192
  %214 = vmatpush.bf16.msra.mxu0 %v191
  %215 = vmatmul.bf16.gmra.mxu0 %v138
  %v216 = vpop.f32.mrf.mxu0
  %v217 = vadd.f32 %v157, %v216
  %v218 = vpop.f32.mrf.mxu0
  %219 = vdwg.mxu0
  %vm220 = vcmask 31744
  %221 = vst.msk [vmem:[%s7] sm:$0xff] %vm220, %v217
  // Predicated region
  $region30: #{qnetwork_forward.1} parent=0 // pred_check
    _
  $region31: #{qnetwork_forward.1} parent=0 // pred_check_branch
    %223 = sbr.rel (0) target = $region33
  $region32: #{qnetwork_forward.1} parent=0 // pred_region
    _
  $region33: #{qnetwork_forward.1} parent=0 // pred_fallthru
    _
  // Predicated region
  $region34: #{qnetwork_forward.1} parent=0 // pred_check
    _
  $region35: #{qnetwork_forward.1} parent=0 // pred_check_branch
    %225 = sbr.rel (0) target = $region37
  $region36: #{qnetwork_forward.1} parent=0 // pred_region
    _
  $region37: #{qnetwork_forward.1} parent=0 // pred_fallthru
    _

</llo_original>
